<compile_context>
chip_gen: v6e
topology: v6e:2x2x1
jax: 0.10.0
libtpu: 0.0.40
codegen_flags: <defaults>
</compile_context>

<pallas_src>
import functools
import math

import jax
import jax.numpy as jnp
from jax import lax
from jax.experimental import pallas as pl
from jax.experimental.pallas import tpu as pltpu


def _attention_kernel(*refs, eps, mask_value, dh, heads_per_group, has_mask):
    """Grid = (batch, head_group); head_group is the inner ('arbitrary') axis.

    Refs (in order):
      x_ref:    (1, N, D)        input tokens (VMEM-resident across the group axis)
      g_ref:    (1, D)           RMSNorm gain                     [Buffered(1)]
      wqkv_ref: (1, D, 3*G*dh)   this group's fused q|k|v projection (scale in q)
      wout_ref: (1, G*dh, D)     this group's slice of W_out^T
      bout_ref: (1, D)           output bias                      [Buffered(1)]
      bias_ref: (G, N, N)        this group's additive attention bias (source dtype)
      mask_ref: (1, 1, N)        audio key mask as float (only when has_mask)
      o_ref:    (1, N, D)        output block for this batch element
      xn_scr:   (N, D)  cdt      scratch: RMSNorm'ed activations (computed at group 0)
      acc_scr:  (N, D)  f32      scratch: output-projection accumulator over groups
    """
    if has_mask:
        (x_ref, g_ref, wqkv_ref, wout_ref, bout_ref, bias_ref, mask_ref,
         o_ref, xn_scr, acc_scr) = refs
    else:
        (x_ref, g_ref, wqkv_ref, wout_ref, bout_ref, bias_ref,
         o_ref, xn_scr, acc_scr) = refs
        mask_ref = None

    grp = pl.program_id(1)
    last_grp = pl.num_programs(1) - 1
    cdt = xn_scr.dtype                      # MXU operand dtype (model dtype)
    N, D = xn_scr.shape
    G = heads_per_group
    gd = G * dh

    @pl.when(grp == 0)
    def _prologue():
        # RMSNorm (lucidrains): F.normalize(x, dim=-1) * sqrt(D) * g, norm clamped at eps.
        x = x_ref[0].astype(jnp.float32)                               # (N, D)
        ssq = jnp.sum(x * x, axis=-1, keepdims=True)
        inv = lax.rsqrt(jnp.maximum(ssq, jnp.float32(eps * eps)))
        xn = x * inv * jnp.float32(math.sqrt(D))
        xn = xn * g_ref[...].astype(jnp.float32)                       # (1, D) broadcast
        xn_scr[...] = xn.astype(cdt)
        acc_scr[...] = jnp.zeros_like(acc_scr)

    xn = xn_scr[...]
    # One lane-dense projection for this head group: (N, D) @ (D, 3*G*dh).
    qkv = jnp.dot(xn, wqkv_ref[0], preferred_element_type=jnp.float32).astype(cdt)
    q_g = qkv[:, :gd]                                                  # (N, G*dh)
    kT_g = qkv[:, gd:2 * gd].T                                         # (G*dh, N) one XLU transpose
    v_g = qkv[:, 2 * gd:]                                              # (N, G*dh)

    key_keep = None
    if has_mask:
        key_keep = mask_ref[0] != 0.0                                  # (1, N) bool

    outs = []
    for g in range(G):                      # static unrolled loop -> static lane slices
        q = q_g[:, g * dh:(g + 1) * dh]                                # (N, dh)
        kT = kT_g[g * dh:(g + 1) * dh, :]                              # (dh, N)
        v = v_g[:, g * dh:(g + 1) * dh]                                # (N, dh)

        # Scores in f32 (q already carries 1/sqrt(dh)); per-head bias cast in-register.
        s = jnp.dot(q, kT, preferred_element_type=jnp.float32)        # (N, N)
        s = s + bias_ref[g].astype(jnp.float32)
        if has_mask:
            s = jnp.where(key_keep, s, jnp.float32(mask_value))

        # Softmax with deferred normalization; exact divide for f32 parity.
        m = jnp.max(s, axis=-1, keepdims=True)
        p = jnp.exp(s - m)
        denom = jnp.sum(p, axis=-1, keepdims=True)
        o_h = jnp.dot(p.astype(cdt), v, preferred_element_type=jnp.float32)  # (N, dh)
        o_h = o_h / denom
        outs.append(o_h.astype(cdt))

    o_grp = outs[0] if G == 1 else jnp.concatenate(outs, axis=-1)      # (N, G*dh)

    # Fused output projection: G*dh-deep contraction, accumulated across groups.
    acc_scr[...] += jnp.dot(o_grp, wout_ref[0], preferred_element_type=jnp.float32)

    @pl.when(grp == last_grp)
    def _finalize():
        out = acc_scr[...] + bout_ref[...].astype(jnp.float32)
        o_ref[0] = out.astype(o_ref.dtype)


def _pick_heads_per_group(num_heads, dim_head, target_lanes=256):
    """Largest divisor of num_heads with heads_per_group*dim_head <= target_lanes."""
    best = 1
    for cand in range(1, num_heads + 1):
        if num_heads % cand == 0 and cand * dim_head <= target_lanes:
            best = cand
    return best


def _vmem_limit_bytes(frac=0.8):
    """~80% of this chip's physical VMEM; None -> compiler default if query fails."""
    try:
        cap = getattr(pltpu.get_tpu_info(), "vmem_capacity_bytes", None)
        if cap:
            return int(cap * frac)
    except Exception:
        pass
    return None


def attention_forward(x, attn_bias, params, *, dim_head=32, audio_mask=None,
                      heads_per_group=None):
    """Forward pass of Attention (time=None branch, eval mode / dropout_p = 0)."""
    B, N, D = x.shape
    assert D % dim_head == 0, "Dimension must be divisible by the head dimension"
    H = D // dim_head
    cdt = x.dtype
    sm_scale = 1.0 / math.sqrt(dim_head)

    if heads_per_group is None:
        heads_per_group = _pick_heads_per_group(H, dim_head)
    G = heads_per_group
    assert H % G == 0
    num_groups = H // G
    gd = G * dim_head

    # Per-group weight layouts so the kernel never slices channels dynamically.
    # PyTorch Linear: y = x @ W^T ; qkv channel layout is '(h d)' (head-major).
    wq, wk, wv = jnp.split(params["w_qkv"], 3, axis=0)                 # each (D, D), out x in

    def to_groups(w_t):                                                # (D, D) -> (ng, D, G*dh)
        return w_t.reshape(D, num_groups, gd).transpose(1, 0, 2).astype(cdt)

    # Fold the softmax scale into the q projection (done in f32, cast once).
    wq_t = wq.T.astype(jnp.float32) * sm_scale
    wqkv_g = jnp.concatenate(
        [to_groups(wq_t), to_groups(wk.T.astype(jnp.float32)), to_groups(wv.T.astype(jnp.float32))],
        axis=-1)                                                       # (ng, D, 3*G*dh)
    wout_g = params["w_out"].T.reshape(num_groups, gd, D).astype(cdt)  # (ng, G*dh, D)

    g = params["g"].reshape(1, D)
    bout = params["b_out"].reshape(1, D)
    bias = attn_bias                                                   # (H, N, N), source dtype
    has_mask = audio_mask is not None

    inputs = [x, g, wqkv_g, wout_g, bout, bias]
    in_specs = [
        pl.BlockSpec((1, N, D), lambda b, grp: (b, 0, 0)),                        # x
        pl.BlockSpec((1, D), lambda b, grp: (0, 0), pipeline_mode=pl.Buffered(1)),  # RMSNorm gain
        pl.BlockSpec((1, D, 3 * gd), lambda b, grp: (grp, 0, 0)),                 # W_qkv group
        pl.BlockSpec((1, gd, D), lambda b, grp: (grp, 0, 0)),                     # W_out group
        pl.BlockSpec((1, D), lambda b, grp: (0, 0), pipeline_mode=pl.Buffered(1)),  # b_out
        pl.BlockSpec((G, N, N), lambda b, grp: (grp, 0, 0)),                      # bias group
    ]
    if has_mask:
        inputs.append(audio_mask.reshape(B, 1, N).astype(jnp.float32))
        in_specs.append(pl.BlockSpec((1, 1, N), lambda b, grp: (b, 0, 0)))        # key mask

    kernel = functools.partial(
        _attention_kernel, eps=1e-12,
        mask_value=-float(jnp.finfo(jnp.float32).max),
        dh=dim_head, heads_per_group=G, has_mask=has_mask)

    return pl.pallas_call(
        kernel,
        out_shape=jax.ShapeDtypeStruct((B, N, D), x.dtype),
        grid=(B, num_groups),
        in_specs=in_specs,
        out_specs=pl.BlockSpec((1, N, D), lambda b, grp: (b, 0, 0)),
        scratch_shapes=[
            pltpu.VMEM((N, D), cdt),           # RMSNorm'ed activations
            pltpu.VMEM((N, D), jnp.float32),   # output-projection accumulator
        ],
        compiler_params=pltpu.CompilerParams(
            dimension_semantics=("parallel", "arbitrary"),
            vmem_limit_bytes=_vmem_limit_bytes(),
        ),
    )(*inputs)


def attention_ref(x, attn_bias, params, *, dim_head=32, audio_mask=None):
    """Pure-JAX reference mirroring the PyTorch forward (time=None, eval mode)."""
    B, N, D = x.shape
    H = D // dim_head
    xf = x.astype(jnp.float32)
    norm = jnp.sqrt(jnp.sum(xf * xf, axis=-1, keepdims=True))
    xn = xf / jnp.maximum(norm, 1e-12) * math.sqrt(D) * params["g"].astype(jnp.float32)
    qkv = xn @ params["w_qkv"].astype(jnp.float32).T
    q, k, v = jnp.split(qkv, 3, axis=-1)
    to_heads = lambda t: t.reshape(B, N, H, dim_head).transpose(0, 2, 1, 3)
    q, k, v = map(to_heads, (q, k, v))
    bias = jnp.broadcast_to(attn_bias[None].astype(jnp.float32), (B, H, N, N))
    if audio_mask is not None:
        bias = jnp.where(audio_mask[:, None, None, :], bias, -jnp.finfo(jnp.float32).max)
    s = jnp.einsum('bhid,bhjd->bhij', q, k) / math.sqrt(dim_head) + bias
    p = jax.nn.softmax(s, axis=-1)
    o = jnp.einsum('bhij,bhjd->bhid', p, v)
    o = o.transpose(0, 2, 1, 3).reshape(B, N, D)
    return (o @ params["w_out"].astype(jnp.float32).T
            + params["b_out"].astype(jnp.float32)).astype(x.dtype)


if __name__ == "__main__":
    key = jax.random.PRNGKey(0)
    B, N, dim, dim_head = 2, 8, 64, 32
    H = dim // dim_head
    ks = jax.random.split(key, 6)

    x = jax.random.normal(ks[0], (B, N, dim), jnp.float32)
    attn_bias = 0.1 * jax.random.normal(ks[1], (H, N, N), jnp.float32)
    # Deterministic synthetic parameters (module __init__ shapes).
    # NOTE: the reference zero-inits to_out when time_cond_dim is None; we use small
    # random values here so the kernel output is non-trivial.
    params = {
        "g": jnp.ones((dim,), jnp.float32),                                     # RMSNorm gain
        "w_qkv": 0.05 * jax.random.normal(ks[2], (3 * dim, dim), jnp.float32),  # to_qkv.weight
        "w_out": 0.05 * jax.random.normal(ks[3], (dim, dim), jnp.float32),      # to_out.weight
        "b_out": 0.01 * jax.random.normal(ks[4], (dim,), jnp.float32),          # to_out.bias
    }
    audio_mask = jnp.ones((B, N), dtype=bool).at[1, -2:].set(False)

    # Masked path.
    out = attention_forward(x, attn_bias, params, dim_head=dim_head, audio_mask=audio_mask)
    out = jax.block_until_ready(out)
    ref = attention_ref(x, attn_bias, params, dim_head=dim_head, audio_mask=audio_mask)
    assert out.shape == (B, N, dim) and out.dtype == x.dtype
    assert jnp.allclose(out, ref, atol=2e-3, rtol=2e-3), float(jnp.max(jnp.abs(out - ref)))

    # Statically specialized no-mask path.
    out_nm = attention_forward(x, attn_bias, params, dim_head=dim_head, audio_mask=None)
    out_nm = jax.block_until_ready(out_nm)
    ref_nm = attention_ref(x, attn_bias, params, dim_head=dim_head, audio_mask=None)
    assert jnp.allclose(out_nm, ref_nm, atol=2e-3, rtol=2e-3), \
        float(jnp.max(jnp.abs(out_nm - ref_nm)))

    print("KERNEL_OK")
</pallas_src>

<mosaic_0001>
module attributes {stable_mosaic.version = 11 : i64} {
  func.func @_attention_kernel(%arg0: i32, %arg1: i32, %arg2: memref<1x8x64xf32, #tpu.memory_space<vmem>>, %arg3: memref<1x64xf32, #tpu.memory_space<vmem>>, %arg4: memref<1x64x192xf32, #tpu.memory_space<vmem>>, %arg5: memref<1x64x64xf32, #tpu.memory_space<vmem>>, %arg6: memref<1x64xf32, #tpu.memory_space<vmem>>, %arg7: memref<2x8x8xf32, #tpu.memory_space<vmem>>, %arg8: memref<1x1x8xf32, #tpu.memory_space<vmem>>, %arg9: memref<1x8x64xf32, #tpu.memory_space<vmem>>, %arg10: memref<8x64xf32, #tpu.memory_space<vmem>>, %arg11: memref<8x64xf32, #tpu.memory_space<vmem>>) attributes {dimension_semantics = [#tpu.dimension_semantics<parallel>, #tpu.dimension_semantics<arbitrary>], iteration_bounds = array<i64: 2, 1>, scalar_prefetch = 0 : i64, scratch_operands = 2 : i64, tpu.core_type = #tpu.core_type<tc>, window_params = [{transform_indices = @transform_0, window_bounds = array<i64: 1, 8, 64>}, {pipeline_mode = #tpu.pipeline_mode<synchronous>, transform_indices = @transform_1, window_bounds = array<i64: 1, 64>}, {transform_indices = @transform_2, window_bounds = array<i64: 1, 64, 192>}, {transform_indices = @transform_3, window_bounds = array<i64: 1, 64, 64>}, {pipeline_mode = #tpu.pipeline_mode<synchronous>, transform_indices = @transform_4, window_bounds = array<i64: 1, 64>}, {transform_indices = @transform_5, window_bounds = array<i64: 2, 8, 8>}, {transform_indices = @transform_6, window_bounds = array<i64: 1, 1, 8>}, {transform_indices = @transform_7, window_bounds = array<i64: 1, 8, 64>}]} {
    %c0_i32 = arith.constant 0 : i32
    %0 = arith.cmpi eq, %arg1, %c0_i32 : i32
    %1 = arith.extui %0 : i1 to i32
    %c0_i32_0 = arith.constant 0 : i32
    %2 = arith.cmpi ne, %1, %c0_i32_0 : i32
    scf.if %2 {
      %c0_34 = arith.constant 0 : index
      %c0_35 = arith.constant 0 : index
      %c0_36 = arith.constant 0 : index
      %67 = vector.load %arg2[%c0_34, %c0_35, %c0_36] : memref<1x8x64xf32, #tpu.memory_space<vmem>>, vector<1x8x64xf32>
      %68 = vector.shape_cast %67 : vector<1x8x64xf32> to vector<8x64xf32>
      %69 = arith.mulf %68, %68 : vector<8x64xf32>
      %cst_37 = arith.constant dense<0.000000e+00> : vector<8xf32>
      %70 = vector.multi_reduction <add>, %69, %cst_37 [1] : vector<8x64xf32> to vector<8xf32>
      %71 = vector.shape_cast %70 : vector<8xf32> to vector<8x1xf32>
      %cst_38 = arith.constant 1.000000e-24 : f32
      %72 = vector.broadcast %cst_38 : f32 to vector<8x1xf32>
      %73 = arith.maximumf %71, %72 : vector<8x1xf32>
      %74 = math.rsqrt %73 : vector<8x1xf32>
      %75 = vector.broadcast %74 : vector<8x1xf32> to vector<8x64xf32>
      %76 = arith.mulf %68, %75 : vector<8x64xf32>
      %cst_39 = arith.constant 8.000000e+00 : f32
      %77 = vector.broadcast %cst_39 : f32 to vector<8x64xf32>
      %78 = arith.mulf %76, %77 : vector<8x64xf32>
      %c0_40 = arith.constant 0 : index
      %c0_41 = arith.constant 0 : index
      %79 = vector.load %arg3[%c0_40, %c0_41] : memref<1x64xf32, #tpu.memory_space<vmem>>, vector<1x64xf32>
      %80 = vector.broadcast %79 : vector<1x64xf32> to vector<8x64xf32>
      %81 = arith.mulf %78, %80 : vector<8x64xf32>
      %c0_42 = arith.constant 0 : index
      %c0_43 = arith.constant 0 : index
      %82 = vector.load %arg10[%c0_42, %c0_43] : memref<8x64xf32, #tpu.memory_space<vmem>>, vector<8x64xf32>
      tpu.vector_store %arg10[%c0_42, %c0_43], %81 {strides = array<i32>} : memref<8x64xf32, #tpu.memory_space<vmem>>, vector<8x64xf32>,
      %cst_44 = arith.constant 0.000000e+00 : f32
      %83 = vector.broadcast %cst_44 : f32 to vector<8x64xf32>
      %c0_45 = arith.constant 0 : index
      %c0_46 = arith.constant 0 : index
      %84 = vector.load %arg11[%c0_45, %c0_46] : memref<8x64xf32, #tpu.memory_space<vmem>>, vector<8x64xf32>
      tpu.vector_store %arg11[%c0_45, %c0_46], %83 {strides = array<i32>} : memref<8x64xf32, #tpu.memory_space<vmem>>, vector<8x64xf32>,
    } else {
    }
    %c0 = arith.constant 0 : index
    %c0_1 = arith.constant 0 : index
    %3 = vector.load %arg10[%c0, %c0_1] : memref<8x64xf32, #tpu.memory_space<vmem>>, vector<8x64xf32>
    %c0_2 = arith.constant 0 : index
    %c0_3 = arith.constant 0 : index
    %c0_4 = arith.constant 0 : index
    %4 = vector.load %arg4[%c0_2, %c0_3, %c0_4] : memref<1x64x192xf32, #tpu.memory_space<vmem>>, vector<1x64x192xf32>
    %5 = vector.shape_cast %4 : vector<1x64x192xf32> to vector<64x192xf32>
    %cst = arith.constant dense<0.000000e+00> : vector<8x192xf32>
    %6 = tpu.matmul %3, %5, %cst {dimension_numbers = #tpu.dot_dimension_numbers<[1], [0], [0], [1], [0, 0, 1, 1], [], []>} : vector<8x64xf32>, vector<64x192xf32>, vector<8x192xf32> -> vector<8x192xf32>
    %7 = vector.extract_strided_slice %6 {offsets = [0, 0], sizes = [8, 64], strides = [1, 1]} : vector<8x192xf32> to vector<8x64xf32>
    %8 = vector.extract_strided_slice %6 {offsets = [0, 64], sizes = [8, 64], strides = [1, 1]} : vector<8x192xf32> to vector<8x64xf32>
    %9 = tpu.transpose %8, [1, 0] : vector<8x64xf32> -> vector<64x8xf32>
    %10 = vector.extract_strided_slice %6 {offsets = [0, 128], sizes = [8, 64], strides = [1, 1]} : vector<8x192xf32> to vector<8x64xf32>
    %c0_5 = arith.constant 0 : index
    %c0_6 = arith.constant 0 : index
    %c0_7 = arith.constant 0 : index
    %11 = vector.load %arg8[%c0_5, %c0_6, %c0_7] : memref<1x1x8xf32, #tpu.memory_space<vmem>>, vector<1x1x8xf32>
    %12 = vector.shape_cast %11 : vector<1x1x8xf32> to vector<1x8xf32>
    %cst_8 = arith.constant 0.000000e+00 : f32
    %13 = vector.broadcast %cst_8 : f32 to vector<1x8xf32>
    %14 = arith.cmpf one, %12, %13 : vector<1x8xf32>
    %15 = vector.extract_strided_slice %7 {offsets = [0, 0], sizes = [8, 32], strides = [1, 1]} : vector<8x64xf32> to vector<8x32xf32>
    %16 = vector.extract_strided_slice %9 {offsets = [0, 0], sizes = [32, 8], strides = [1, 1]} : vector<64x8xf32> to vector<32x8xf32>
    %17 = vector.extract_strided_slice %10 {offsets = [0, 0], sizes = [8, 32], strides = [1, 1]} : vector<8x64xf32> to vector<8x32xf32>
    %cst_9 = arith.constant dense<0.000000e+00> : vector<8x8xf32>
    %18 = tpu.matmul %15, %16, %cst_9 {dimension_numbers = #tpu.dot_dimension_numbers<[1], [0], [0], [1], [0, 0, 1, 1], [], []>} : vector<8x32xf32>, vector<32x8xf32>, vector<8x8xf32> -> vector<8x8xf32>
    %c0_10 = arith.constant 0 : index
    %c0_11 = arith.constant 0 : index
    %c0_12 = arith.constant 0 : index
    %19 = vector.load %arg7[%c0_10, %c0_11, %c0_12] : memref<2x8x8xf32, #tpu.memory_space<vmem>>, vector<1x8x8xf32>
    %20 = vector.shape_cast %19 : vector<1x8x8xf32> to vector<8x8xf32>
    %21 = arith.addf %18, %20 : vector<8x8xf32>
    %cst_13 = arith.constant -3.40282347E+38 : f32
    %22 = vector.shape_cast %14 : vector<1x8xi1> to vector<1x8xi1>
    %23 = vector.broadcast %22 : vector<1x8xi1> to vector<8x8xi1>
    %24 = vector.broadcast %cst_13 : f32 to vector<8x8xf32>
    %25 = arith.select %23, %21, %24 : vector<8x8xi1>, vector<8x8xf32>
    %cst_14 = arith.constant dense<0xFF800000> : vector<8xf32>
    %26 = vector.multi_reduction <maximumf>, %25, %cst_14 [1] : vector<8x8xf32> to vector<8xf32>
    %27 = vector.shape_cast %26 : vector<8xf32> to vector<8x1xf32>
    %28 = vector.broadcast %27 : vector<8x1xf32> to vector<8x8xf32>
    %29 = arith.subf %25, %28 : vector<8x8xf32>
    %30 = math.exp %29 : vector<8x8xf32>
    %cst_15 = arith.constant dense<0.000000e+00> : vector<8xf32>
    %31 = vector.multi_reduction <add>, %30, %cst_15 [1] : vector<8x8xf32> to vector<8xf32>
    %32 = vector.shape_cast %31 : vector<8xf32> to vector<8x1xf32>
    %cst_16 = arith.constant dense<0.000000e+00> : vector<8x32xf32>
    %33 = tpu.matmul %30, %17, %cst_16 {dimension_numbers = #tpu.dot_dimension_numbers<[1], [0], [0], [1], [0, 0, 1, 1], [], []>} : vector<8x8xf32>, vector<8x32xf32>, vector<8x32xf32> -> vector<8x32xf32>
    %34 = vector.broadcast %32 : vector<8x1xf32> to vector<8x32xf32>
    %35 = arith.divf %33, %34 : vector<8x32xf32>
    %36 = vector.extract_strided_slice %7 {offsets = [0, 32], sizes = [8, 32], strides = [1, 1]} : vector<8x64xf32> to vector<8x32xf32>
    %37 = vector.extract_strided_slice %9 {offsets = [32, 0], sizes = [32, 8], strides = [1, 1]} : vector<64x8xf32> to vector<32x8xf32>
    %38 = vector.extract_strided_slice %10 {offsets = [0, 32], sizes = [8, 32], strides = [1, 1]} : vector<8x64xf32> to vector<8x32xf32>
    %cst_17 = arith.constant dense<0.000000e+00> : vector<8x8xf32>
    %39 = tpu.matmul %36, %37, %cst_17 {dimension_numbers = #tpu.dot_dimension_numbers<[1], [0], [0], [1], [0, 0, 1, 1], [], []>} : vector<8x32xf32>, vector<32x8xf32>, vector<8x8xf32> -> vector<8x8xf32>
    %c1 = arith.constant 1 : index
    %c0_18 = arith.constant 0 : index
    %c0_19 = arith.constant 0 : index
    %40 = vector.load %arg7[%c1, %c0_18, %c0_19] : memref<2x8x8xf32, #tpu.memory_space<vmem>>, vector<1x8x8xf32>
    %41 = vector.shape_cast %40 : vector<1x8x8xf32> to vector<8x8xf32>
    %42 = arith.addf %39, %41 : vector<8x8xf32>
    %cst_20 = arith.constant -3.40282347E+38 : f32
    %43 = vector.shape_cast %14 : vector<1x8xi1> to vector<1x8xi1>
    %44 = vector.broadcast %43 : vector<1x8xi1> to vector<8x8xi1>
    %45 = vector.broadcast %cst_20 : f32 to vector<8x8xf32>
    %46 = arith.select %44, %42, %45 : vector<8x8xi1>, vector<8x8xf32>
    %cst_21 = arith.constant dense<0xFF800000> : vector<8xf32>
    %47 = vector.multi_reduction <maximumf>, %46, %cst_21 [1] : vector<8x8xf32> to vector<8xf32>
    %48 = vector.shape_cast %47 : vector<8xf32> to vector<8x1xf32>
    %49 = vector.broadcast %48 : vector<8x1xf32> to vector<8x8xf32>
    %50 = arith.subf %46, %49 : vector<8x8xf32>
    %51 = math.exp %50 : vector<8x8xf32>
    %cst_22 = arith.constant dense<0.000000e+00> : vector<8xf32>
    %52 = vector.multi_reduction <add>, %51, %cst_22 [1] : vector<8x8xf32> to vector<8xf32>
    %53 = vector.shape_cast %52 : vector<8xf32> to vector<8x1xf32>
    %cst_23 = arith.constant dense<0.000000e+00> : vector<8x32xf32>
    %54 = tpu.matmul %51, %38, %cst_23 {dimension_numbers = #tpu.dot_dimension_numbers<[1], [0], [0], [1], [0, 0, 1, 1], [], []>} : vector<8x8xf32>, vector<8x32xf32>, vector<8x32xf32> -> vector<8x32xf32>
    %55 = vector.broadcast %53 : vector<8x1xf32> to vector<8x32xf32>
    %56 = arith.divf %54, %55 : vector<8x32xf32>
    %57 = tpu.concatenate %35, %56 in 1 : vector<8x32xf32>, vector<8x32xf32> -> vector<8x64xf32>
    %c0_24 = arith.constant 0 : index
    %c0_25 = arith.constant 0 : index
    %58 = vector.load %arg11[%c0_24, %c0_25] : memref<8x64xf32, #tpu.memory_space<vmem>>, vector<8x64xf32>
    %c0_26 = arith.constant 0 : index
    %c0_27 = arith.constant 0 : index
    %c0_28 = arith.constant 0 : index
    %59 = vector.load %arg5[%c0_26, %c0_27, %c0_28] : memref<1x64x64xf32, #tpu.memory_space<vmem>>, vector<1x64x64xf32>
    %60 = vector.shape_cast %59 : vector<1x64x64xf32> to vector<64x64xf32>
    %cst_29 = arith.constant dense<0.000000e+00> : vector<8x64xf32>
    %61 = tpu.matmul %57, %60, %cst_29 {dimension_numbers = #tpu.dot_dimension_numbers<[1], [0], [0], [1], [0, 0, 1, 1], [], []>} : vector<8x64xf32>, vector<64x64xf32>, vector<8x64xf32> -> vector<8x64xf32>
    %62 = arith.addf %58, %61 : vector<8x64xf32>
    %c0_30 = arith.constant 0 : index
    %c0_31 = arith.constant 0 : index
    %63 = vector.load %arg11[%c0_30, %c0_31] : memref<8x64xf32, #tpu.memory_space<vmem>>, vector<8x64xf32>
    tpu.vector_store %arg11[%c0_30, %c0_31], %62 {strides = array<i32>} : memref<8x64xf32, #tpu.memory_space<vmem>>, vector<8x64xf32>,
    %c0_i32_32 = arith.constant 0 : i32
    %64 = arith.cmpi eq, %arg1, %c0_i32_32 : i32
    %65 = arith.extui %64 : i1 to i32
    %c0_i32_33 = arith.constant 0 : i32
    %66 = arith.cmpi ne, %65, %c0_i32_33 : i32
    scf.if %66 {
      %c0_34 = arith.constant 0 : index
      %c0_35 = arith.constant 0 : index
      %67 = vector.load %arg11[%c0_34, %c0_35] : memref<8x64xf32, #tpu.memory_space<vmem>>, vector<8x64xf32>
      %c0_36 = arith.constant 0 : index
      %c0_37 = arith.constant 0 : index
      %68 = vector.load %arg6[%c0_36, %c0_37] : memref<1x64xf32, #tpu.memory_space<vmem>>, vector<1x64xf32>
      %69 = vector.broadcast %68 : vector<1x64xf32> to vector<8x64xf32>
      %70 = arith.addf %67, %69 : vector<8x64xf32>
      %c0_38 = arith.constant 0 : index
      %c0_39 = arith.constant 0 : index
      %c0_40 = arith.constant 0 : index
      %71 = vector.load %arg9[%c0_38, %c0_39, %c0_40] : memref<1x8x64xf32, #tpu.memory_space<vmem>>, vector<1x8x64xf32>
      %72 = vector.shape_cast %71 : vector<1x8x64xf32> to vector<8x64xf32>
      %73 = vector.shape_cast %70 : vector<8x64xf32> to vector<1x8x64xf32>
      tpu.vector_store %arg9[%c0_38, %c0_39, %c0_40], %73 {strides = array<i32>} : memref<1x8x64xf32, #tpu.memory_space<vmem>>, vector<1x8x64xf32>,
    } else {
    }
    return
  }
  func.func @transform_0(%arg0: i32, %arg1: i32) -> (i32, i32, i32) {
    %c0_i32 = arith.constant 0 : i32
    %c0_i32_0 = arith.constant 0 : i32
    %c0_i32_1 = arith.constant 0 : i32
    return %arg0, %c0_i32, %c0_i32_0 : i32, i32, i32
  }
  func.func @transform_1(%arg0: i32, %arg1: i32) -> (i32, i32) {
    %c0_i32 = arith.constant 0 : i32
    %c0_i32_0 = arith.constant 0 : i32
    %c0_i32_1 = arith.constant 0 : i32
    return %c0_i32, %c0_i32_0 : i32, i32
  }
  func.func @transform_2(%arg0: i32, %arg1: i32) -> (i32, i32, i32) {
    %c0_i32 = arith.constant 0 : i32
    %c0_i32_0 = arith.constant 0 : i32
    %c0_i32_1 = arith.constant 0 : i32
    return %arg1, %c0_i32, %c0_i32_0 : i32, i32, i32
  }
  func.func @transform_3(%arg0: i32, %arg1: i32) -> (i32, i32, i32) {
    %c0_i32 = arith.constant 0 : i32
    %c0_i32_0 = arith.constant 0 : i32
    %c0_i32_1 = arith.constant 0 : i32
    return %arg1, %c0_i32, %c0_i32_0 : i32, i32, i32
  }
  func.func @transform_4(%arg0: i32, %arg1: i32) -> (i32, i32) {
    %c0_i32 = arith.constant 0 : i32
    %c0_i32_0 = arith.constant 0 : i32
    %c0_i32_1 = arith.constant 0 : i32
    return %c0_i32, %c0_i32_0 : i32, i32
  }
  func.func @transform_5(%arg0: i32, %arg1: i32) -> (i32, i32, i32) {
    %c0_i32 = arith.constant 0 : i32
    %c0_i32_0 = arith.constant 0 : i32
    %c0_i32_1 = arith.constant 0 : i32
    return %arg1, %c0_i32, %c0_i32_0 : i32, i32, i32
  }
  func.func @transform_6(%arg0: i32, %arg1: i32) -> (i32, i32, i32) {
    %c0_i32 = arith.constant 0 : i32
    %c0_i32_0 = arith.constant 0 : i32
    %c0_i32_1 = arith.constant 0 : i32
    return %arg0, %c0_i32, %c0_i32_0 : i32, i32, i32
  }
  func.func @transform_7(%arg0: i32, %arg1: i32) -> (i32, i32, i32) {
    %c0_i32 = arith.constant 0 : i32
    %c0_i32_0 = arith.constant 0 : i32
    %c0_i32_1 = arith.constant 0 : i32
    return %arg0, %c0_i32, %c0_i32_0 : i32, i32, i32
  }
}

</mosaic_0001>

<llo_original>
// kernel: tpu_custom_call.1
$region0: #{tpu_custom_call.1}
  #allocation0 [shape = 'u32[]', space=smem, size = 0x4, offset = 0x4, fixed_abs, tag = 'smem constant byte address 0x4 - core index']
  #allocation1 [shape = 'u32[144,128]{1,0:T(1,128)}', space=vmem, size = 0x12000, scoped, tag = 'internal scratch']
  #allocation2 [shape = 'f32[8,64]{1,0:T(8,128)}', space=vmem, size = 0x1000, scoped, tag = 'scratch operand']
  #allocation3 [shape = 'f32[8,64]{1,0:T(8,128)}', space=vmem, size = 0x1000, scoped, tag = 'scratch operand']
  %s0 = inlined_call_operand.hbm [shape: f32[2,8,64], index: 0, kind: input, shape index: {}]
  %s1 = inlined_call_operand.vmem [shape: f32[1,64], index: 1, kind: input, shape index: {}]
  %s2 = inlined_call_operand.hbm [shape: f32[1,64,192], index: 2, kind: input, shape index: {}]
  %s3 = inlined_call_operand.hbm [shape: f32[1,64,64], index: 3, kind: input, shape index: {}]
  %s4 = inlined_call_operand.vmem [shape: f32[1,64], index: 4, kind: input, shape index: {}]
  %s5 = inlined_call_operand.hbm [shape: f32[2,8,8], index: 5, kind: input, shape index: {}]
  %s6 = inlined_call_operand.vmem [shape: f32[2,1,8], index: 6, kind: input, shape index: {}]
  %s7 = inlined_call_operand.hbm [shape: f32[2,8,64], index: 7, kind: output, shape index: {}]
  %s8 = sld [smem:[#allocation0]]
  $region85: #{tpu_custom_call.1} parent=0
    _
  %s10 = ssub.s32 1, %s8
  %s11 = scalar_select 0, %s10, %s8
  $region1: #{tpu_custom_call.1} parent=0
    #allocation4 [shape = 'u8[8192]{0}', space=vmem, size = 0x2000, scoped, tag = 'input window, operand 0']
    #allocation5 [shape = 's32[2]{0}', space=sflag, size = 0x8, scoped, tag = 'scoped memory for tpu_custom_call.1']
    #allocation6 [shape = 's32[2]{0}', space=sflag, size = 0x8, scoped, tag = 'scoped memory for tpu_custom_call.1']
    #allocation7 [shape = 'u8[65536]{0}', space=vmem, size = 0x10000, scoped, tag = 'input window, operand 2, single buffered']
    #allocation8 [shape = 's32[1]{0}', space=sflag, size = 0x4, scoped, tag = 'scoped memory for tpu_custom_call.1']
    #allocation9 [shape = 'u8[32768]{0}', space=vmem, size = 0x8000, scoped, tag = 'input window, operand 3, single buffered']
    #allocation10 [shape = 'u8[8192]{0}', space=vmem, size = 0x2000, scoped, tag = 'input window, operand 5, single buffered']
    #allocation11 [shape = 's32[1]{0}', space=sflag, size = 0x4, scoped, tag = 'scoped memory for tpu_custom_call.1']
    #allocation12 [shape = 'u8[8192]{0}', space=vmem, size = 0x2000, scoped, tag = 'output window, operand 0']
    %12 = vsyncpa [#allocation5], 0
    %s13 = scalar_lea.sflag [#allocation5], 1
    %14 = vsyncpa %s13, 0
    %15 = vsyncpa [#allocation8], 0
    %16 = vsyncpa [#allocation11], 0
    %17 = vsyncpa [#allocation6], 0
    %s18 = scalar_lea.sflag [#allocation6], 1
    %19 = vsyncpa %s18, 0
    loop: start=0, step=1, limit=4
    $region2: #{tpu_custom_call.1} parent=1 // loop_pre_header
      _
    $region3: #{tpu_custom_call.1} parent=1 // loop_header
      %s21 = sphi 0, %s25
      %p22 = scmp.ge.s32.totalorder %s21, 4
      %s28 = sphi 0, %s40
      %s29 = sphi 0, %s36
      %s30 = sphi 0, %s28
      %s31 = sphi 0, %s29
      %s32 = sphi 0, %s30
      %s33 = sphi 0, %s31
      %s43 = sphi 0, %s45
      %s46 = sphi 0, %s43
      %s47 = sphi 0, %s46
      %s63 = sphi 0, %s47
      %s67 = sphi 0, %s67
      %s69 = sphi 0, %s67
      %s70 = sphi 0, %s69
      %s84 = sphi 0, %s70
      %s90 = sphi 0, %s92
      %s93 = sphi 0, %s90
      %s94 = sphi 0, %s93
      %s110 = sphi 0, %s94
      %s116 = sphi 0, %s118
      %s119 = sphi 0, %s116
      %s120 = sphi 0, %s119
      %s136 = sphi 0, %s120
      %s140 = sphi 0, %s140
      %s142 = sphi 0, %s140
      %s143 = sphi 0, %s142
      %s157 = sphi 0, %s143
      %s163 = sphi 0, %s165
      %s166 = sphi 0, %s163
      %s167 = sphi 0, %s166
      %s183 = sphi 0, %s167
      %s189 = sphi 0, %s191
      %s192 = sphi 0, %s189
      %s193 = sphi 0, %s192
      %s209 = sphi 0, %s193
      %s215 = sphi 0, %s217
      %s218 = sphi 0, %s215
      %s219 = sphi 0, %s218
      %s235 = sphi 0, %s219
    $region4: #{tpu_custom_call.1} parent=1 // loop_header_branch
      %24 = sbr.rel (%p22) target = $region8
    $region5: #{tpu_custom_call.1} parent=1 // loop_body
      %s26 = ssub.s32 %s21, 1
      %s27 = ssub.s32 %s21, 2
      %s34 = sadd.s32 1, %s29
      %p35 = scmp.ge.s32.totalorder %s34, 1
      %s36 = scalar_select %p35, 0, %s34
      %s37 = sadd.s32 1, %s28
      %s38 = scalar_select %p35, %s37, %s28
      %p39 = scmp.ge.s32.totalorder %s38, 2
      %s40 = scalar_select %p39, 0, %s38
      %s41 = ssub.s32 %s28, %s40
      %p42 = scmp.eq.s32.totalorder %s41, 0
      %s44 = sadd.s32 %s43, 1
      %s45 = scalar_select %p42, %s43, %s44
      %p48 = pneg %p42
      %p49 = scmp.eq.s32.totalorder %s21, 1
      %p50 = por %p48, %p49
      %p51 = scmp.ne.s32.totalorder %s43, %s46
      %p52 = scmp.eq.s32.totalorder %s21, 0
      %p53 = por %p51, %p52
      %p54 = scmp.ne.s32.totalorder %s43, %s46
      %p55 = scmp.eq.s32.totalorder %s26, 1
      %p56 = por %p54, %p55
      %p57 = scmp.ne.s32.totalorder %s46, %s47
      %p58 = scmp.eq.s32.totalorder %s26, 0
      %p59 = por %p57, %p58
      %p60 = scmp.ne.s32.totalorder %s46, %s47
      %p61 = scmp.eq.s32.totalorder %s27, 1
      %p62 = por %p60, %p61
      %p64 = scmp.ne.s32.totalorder %s47, %s63
      %p65 = scmp.eq.s32.totalorder %s27, 0
      %p66 = por %p64, %p65
      %s68 = sadd.s32 %s67, 1
      %p71 = scmp.eq.s32.totalorder %s21, 1
      %p72 = scmp.ne.s32.totalorder %s67, %s69
      %p73 = scmp.eq.s32.totalorder %s21, 0
      %p74 = por %p72, %p73
      %p75 = scmp.ne.s32.totalorder %s67, %s69
      %p76 = scmp.eq.s32.totalorder %s26, 1
      %p77 = por %p75, %p76
      %p78 = scmp.ne.s32.totalorder %s69, %s70
      %p79 = scmp.eq.s32.totalorder %s26, 0
      %p80 = por %p78, %p79
      %p81 = scmp.ne.s32.totalorder %s69, %s70
      %p82 = scmp.eq.s32.totalorder %s27, 1
      %p83 = por %p81, %p82
      %p85 = scmp.ne.s32.totalorder %s70, %s84
      %p86 = scmp.eq.s32.totalorder %s27, 0
      %p87 = por %p85, %p86
      %s88 = ssub.s32 %s29, %s36
      %p89 = scmp.eq.s32.totalorder %s88, 0
      %s91 = sadd.s32 %s90, 1
      %s92 = scalar_select %p89, %s90, %s91
      %p95 = pneg %p89
      %p96 = scmp.eq.s32.totalorder %s21, 1
      %p97 = por %p95, %p96
      %p98 = scmp.ne.s32.totalorder %s90, %s93
      %p99 = scmp.eq.s32.totalorder %s21, 0
      %p100 = por %p98, %p99
      %p101 = scmp.ne.s32.totalorder %s90, %s93
      %p102 = scmp.eq.s32.totalorder %s26, 1
      %p103 = por %p101, %p102
      %p104 = scmp.ne.s32.totalorder %s93, %s94
      %p105 = scmp.eq.s32.totalorder %s26, 0
      %p106 = por %p104, %p105
      %p107 = scmp.ne.s32.totalorder %s93, %s94
      %p108 = scmp.eq.s32.totalorder %s27, 1
      %p109 = por %p107, %p108
      %p111 = scmp.ne.s32.totalorder %s94, %s110
      %p112 = scmp.eq.s32.totalorder %s27, 0
      %p113 = por %p111, %p112
      %s114 = ssub.s32 %s29, %s36
      %p115 = scmp.eq.s32.totalorder %s114, 0
      %s117 = sadd.s32 %s116, 1
      %s118 = scalar_select %p115, %s116, %s117
      %p121 = pneg %p115
      %p122 = scmp.eq.s32.totalorder %s21, 1
      %p123 = por %p121, %p122
      %p124 = scmp.ne.s32.totalorder %s116, %s119
      %p125 = scmp.eq.s32.totalorder %s21, 0
      %p126 = por %p124, %p125
      %p127 = scmp.ne.s32.totalorder %s116, %s119
      %p128 = scmp.eq.s32.totalorder %s26, 1
      %p129 = por %p127, %p128
      %p130 = scmp.ne.s32.totalorder %s119, %s120
      %p131 = scmp.eq.s32.totalorder %s26, 0
      %p132 = por %p130, %p131
      %p133 = scmp.ne.s32.totalorder %s119, %s120
      %p134 = scmp.eq.s32.totalorder %s27, 1
      %p135 = por %p133, %p134
      %p137 = scmp.ne.s32.totalorder %s120, %s136
      %p138 = scmp.eq.s32.totalorder %s27, 0
      %p139 = por %p137, %p138
      %s141 = sadd.s32 %s140, 1
      %p144 = scmp.eq.s32.totalorder %s21, 1
      %p145 = scmp.ne.s32.totalorder %s140, %s142
      %p146 = scmp.eq.s32.totalorder %s21, 0
      %p147 = por %p145, %p146
      %p148 = scmp.ne.s32.totalorder %s140, %s142
      %p149 = scmp.eq.s32.totalorder %s26, 1
      %p150 = por %p148, %p149
      %p151 = scmp.ne.s32.totalorder %s142, %s143
      %p152 = scmp.eq.s32.totalorder %s26, 0
      %p153 = por %p151, %p152
      %p154 = scmp.ne.s32.totalorder %s142, %s143
      %p155 = scmp.eq.s32.totalorder %s27, 1
      %p156 = por %p154, %p155
      %p158 = scmp.ne.s32.totalorder %s143, %s157
      %p159 = scmp.eq.s32.totalorder %s27, 0
      %p160 = por %p158, %p159
      %s161 = ssub.s32 %s29, %s36
      %p162 = scmp.eq.s32.totalorder %s161, 0
      %s164 = sadd.s32 %s163, 1
      %s165 = scalar_select %p162, %s163, %s164
      %p168 = pneg %p162
      %p169 = scmp.eq.s32.totalorder %s21, 1
      %p170 = por %p168, %p169
      %p171 = scmp.ne.s32.totalorder %s163, %s166
      %p172 = scmp.eq.s32.totalorder %s21, 0
      %p173 = por %p171, %p172
      %p174 = scmp.ne.s32.totalorder %s163, %s166
      %p175 = scmp.eq.s32.totalorder %s26, 1
      %p176 = por %p174, %p175
      %p177 = scmp.ne.s32.totalorder %s166, %s167
      %p178 = scmp.eq.s32.totalorder %s26, 0
      %p179 = por %p177, %p178
      %p180 = scmp.ne.s32.totalorder %s166, %s167
      %p181 = scmp.eq.s32.totalorder %s27, 1
      %p182 = por %p180, %p181
      %p184 = scmp.ne.s32.totalorder %s167, %s183
      %p185 = scmp.eq.s32.totalorder %s27, 0
      %p186 = por %p184, %p185
      %s187 = ssub.s32 %s28, %s40
      %p188 = scmp.eq.s32.totalorder %s187, 0
      %s190 = sadd.s32 %s189, 1
      %s191 = scalar_select %p188, %s189, %s190
      %p194 = pneg %p188
      %p195 = scmp.eq.s32.totalorder %s21, 1
      %p196 = por %p194, %p195
      %p197 = scmp.ne.s32.totalorder %s189, %s192
      %p198 = scmp.eq.s32.totalorder %s21, 0
      %p199 = por %p197, %p198
      %p200 = scmp.ne.s32.totalorder %s189, %s192
      %p201 = scmp.eq.s32.totalorder %s26, 1
      %p202 = por %p200, %p201
      %p203 = scmp.ne.s32.totalorder %s192, %s193
      %p204 = scmp.eq.s32.totalorder %s26, 0
      %p205 = por %p203, %p204
      %p206 = scmp.ne.s32.totalorder %s192, %s193
      %p207 = scmp.eq.s32.totalorder %s27, 1
      %p208 = por %p206, %p207
      %p210 = scmp.ne.s32.totalorder %s193, %s209
      %p211 = scmp.eq.s32.totalorder %s27, 0
      %p212 = por %p210, %p211
      %s213 = ssub.s32 %s28, %s40
      %p214 = scmp.eq.s32.totalorder %s213, 0
      %s216 = sadd.s32 %s215, 1
      %s217 = scalar_select %p214, %s215, %s216
      %p220 = pneg %p214
      %p221 = scmp.eq.s32.totalorder %s21, 1
      %p222 = por %p220, %p221
      %p223 = scmp.ne.s32.totalorder %s215, %s218
      %p224 = scmp.eq.s32.totalorder %s21, 0
      %p225 = por %p223, %p224
      %p226 = scmp.ne.s32.totalorder %s215, %s218
      %p227 = scmp.eq.s32.totalorder %s26, 1
      %p228 = por %p226, %p227
      %p229 = scmp.ne.s32.totalorder %s218, %s219
      %p230 = scmp.eq.s32.totalorder %s26, 0
      %p231 = por %p229, %p230
      %p232 = scmp.ne.s32.totalorder %s218, %s219
      %p233 = scmp.eq.s32.totalorder %s27, 1
      %p234 = por %p232, %p233
      %p236 = scmp.ne.s32.totalorder %s219, %s235
      %p237 = scmp.eq.s32.totalorder %s27, 0
      %p238 = por %p236, %p237
      %p239 = scmp.le.s32.totalorder 1, %s21
      %p240 = scmp.lt.s32.totalorder %s21, 3
      %p241 = pnand %p239, %p240
      %p242 = pneg %p241
      // Predicated region
      $region9: #{tpu_custom_call.1} parent=5 // pred_check
        _
      $region10: #{tpu_custom_call.1} parent=5 // pred_check_branch
        %244 = sbr.rel (%p241) target = $region12
      $region11: #{tpu_custom_call.1} parent=5 // pred_region
        %s245 = ssub.s32 %s21, 1
        // Predicated region
        $region13: #{tpu_custom_call.1} parent=11 // pred_check
          %p246 = pneg %p80
        $region14: #{tpu_custom_call.1} parent=11 // pred_check_branch
          %248 = sbr.rel (%p246) target = $region16
        $region15: #{tpu_custom_call.1} parent=11 // pred_region
          _
        $region16: #{tpu_custom_call.1} parent=11 // pred_fallthru
          _
        // Predicated region
        $region17: #{tpu_custom_call.1} parent=11 // pred_check
          %p249 = pneg %p106
        $region18: #{tpu_custom_call.1} parent=11 // pred_check_branch
          %251 = sbr.rel (%p249) target = $region20
        $region19: #{tpu_custom_call.1} parent=11 // pred_region
          %s253 = ssub.s32 2048, 2048
          %254 = vsyncadd [#allocation8], %s253
          %s255 = smul.addr %s31, 16
          %s256 = smul.addr %s255, 128
          %s257 = scalar_lea.hbm %s2, %s256
          %s258 = sshll.u32 [#allocation7], 4
          %s259 = int_to_ptr.vmem [resolvable:$true] %s258
          %264 = dma.hbm_to_vmem [thread:$0]  %s257, 2048, %s259, [#allocation8], 256, 256, 16
        $region20: #{tpu_custom_call.1} parent=11 // pred_fallthru
          _
        // Predicated region
        $region21: #{tpu_custom_call.1} parent=11 // pred_check
          %p265 = pneg %p132
        $region22: #{tpu_custom_call.1} parent=11 // pred_check_branch
          %267 = sbr.rel (%p265) target = $region24
        $region23: #{tpu_custom_call.1} parent=11 // pred_region
          %s269 = ssub.s32 1024, 1024
          %270 = vsyncadd [#allocation8], %s269
          %s271 = smul.addr %s31, 8
          %s272 = smul.addr %s271, 128
          %s273 = scalar_lea.hbm %s3, %s272
          %s274 = sshll.u32 [#allocation9], 4
          %s275 = int_to_ptr.vmem [resolvable:$true] %s274
          %280 = dma.hbm_to_vmem [thread:$0]  %s273, 1024, %s275, [#allocation8], 128, 128, 8
        $region24: #{tpu_custom_call.1} parent=11 // pred_fallthru
          _
        // Predicated region
        $region25: #{tpu_custom_call.1} parent=11 // pred_check
          %p281 = pneg %p153
        $region26: #{tpu_custom_call.1} parent=11 // pred_check_branch
          %283 = sbr.rel (%p281) target = $region28
        $region27: #{tpu_custom_call.1} parent=11 // pred_region
          _
        $region28: #{tpu_custom_call.1} parent=11 // pred_fallthru
          _
        // Predicated region
        $region29: #{tpu_custom_call.1} parent=11 // pred_check
          %p284 = pneg %p179
        $region30: #{tpu_custom_call.1} parent=11 // pred_check_branch
          %286 = sbr.rel (%p284) target = $region32
        $region31: #{tpu_custom_call.1} parent=11 // pred_region
          %s287 = smul.u32 2, %s31
          %s289 = ssub.s32 256, 256
          %290 = vsyncadd [#allocation11], %s289
          %s291 = smul.addr %s287, 128
          %s292 = scalar_lea.hbm %s5, %s291
          %s293 = sshll.u32 [#allocation10], 4
          %s294 = int_to_ptr.vmem [resolvable:$true] %s293
          %299 = dma.hbm_to_vmem [thread:$0]  %s292, 256, %s294, [#allocation11], 128, 128, 8
        $region32: #{tpu_custom_call.1} parent=11 // pred_fallthru
          _
      $region12: #{tpu_custom_call.1} parent=5 // pred_fallthru
        _
      %p300 = scmp.lt.s32.totalorder %s21, 2
      // Predicated region
      $region33: #{tpu_custom_call.1} parent=5 // pred_check
        %p301 = pneg %p300
      $region34: #{tpu_custom_call.1} parent=5 // pred_check_branch
        %303 = sbr.rel (%p301) target = $region36
      $region35: #{tpu_custom_call.1} parent=5 // pred_region
        // Predicated region
        $region37: #{tpu_custom_call.1} parent=35 // pred_check
          %p304 = pneg %p53
        $region38: #{tpu_custom_call.1} parent=35 // pred_check_branch
          %306 = sbr.rel (%p304) target = $region40
        $region39: #{tpu_custom_call.1} parent=35 // pred_region
          %s307 = sand.u32 %s43, 1
          %s308 = scalar_lea.sflag [#allocation5], %s307
          %s309 = sand.u32 %s43, 1
          %s310 = smul.addr %s309, 8
          %s311 = scalar_lea.vmem [#allocation4], %s310
          %s313 = ssub.s32 128, 128
          %314 = vsyncadd %s308, %s313
          %s315 = smul.addr %s28, 128
          %s316 = scalar_lea.hbm %s0, %s315
          %s318 = sshll.u32 %s311, 4
          %s319 = int_to_ptr.vmem [resolvable:$true] %s318
          %321 = dma.hbm_to_vmem [thread:$0]  %s316, 128, %s319, %s308
        $region40: #{tpu_custom_call.1} parent=35 // pred_fallthru
          _
        // Predicated region
        $region41: #{tpu_custom_call.1} parent=35 // pred_check
          %p322 = pneg %p199
        $region42: #{tpu_custom_call.1} parent=35 // pred_check_branch
          %324 = sbr.rel (%p322) target = $region44
        $region43: #{tpu_custom_call.1} parent=35 // pred_region
          %p325 = scmp.lt.s32.totalorder %s28, 1
          %s326 = scalar_select %p325, %s28, 1
          %s327 = scalar_lea.vmem %s6, %s326
        $region44: #{tpu_custom_call.1} parent=35 // pred_fallthru
          _
      $region36: #{tpu_custom_call.1} parent=5 // pred_fallthru
        _
      %p328 = scmp.le.s32.totalorder 1, %s21
      %p329 = scmp.lt.s32.totalorder %s21, 3
      %p330 = pnand %p328, %p329
      %p331 = pneg %p330
      // Predicated region
      $region45: #{tpu_custom_call.1} parent=5 // pred_check
        _
      $region46: #{tpu_custom_call.1} parent=5 // pred_check_branch
        %333 = sbr.rel (%p330) target = $region48
      $region47: #{tpu_custom_call.1} parent=5 // pred_region
        %s334 = ssub.s32 %s21, 1
        %s335 = sand.u32 %s46, 1
        %s336 = scalar_lea.sflag [#allocation5], %s335
        %s337 = sand.u32 %s46, 1
        %s338 = smul.addr %s337, 8
        %s339 = scalar_lea.vmem [#allocation4], %s338
        // Predicated region
        $region49: #{tpu_custom_call.1} parent=47 // pred_check
          %p340 = pneg %p59
        $region50: #{tpu_custom_call.1} parent=47 // pred_check_branch
          %342 = sbr.rel (%p340) target = $region52
        $region51: #{tpu_custom_call.1} parent=47 // pred_region
          %343 = dma.done %s336, 128
        $region52: #{tpu_custom_call.1} parent=47 // pred_fallthru
          _
        // Predicated region
        $region53: #{tpu_custom_call.1} parent=47 // pred_check
          %p344 = pneg %p106
        $region54: #{tpu_custom_call.1} parent=47 // pred_check_branch
          %346 = sbr.rel (%p344) target = $region56
        $region55: #{tpu_custom_call.1} parent=47 // pred_region
          %347 = dma.done [#allocation8], 2048
        $region56: #{tpu_custom_call.1} parent=47 // pred_fallthru
          _
        // Predicated region
        $region57: #{tpu_custom_call.1} parent=47 // pred_check
          %p348 = pneg %p132
        $region58: #{tpu_custom_call.1} parent=47 // pred_check_branch
          %350 = sbr.rel (%p348) target = $region60
        $region59: #{tpu_custom_call.1} parent=47 // pred_region
          %351 = dma.done [#allocation8], 1024
        $region60: #{tpu_custom_call.1} parent=47 // pred_fallthru
          _
        // Predicated region
        $region61: #{tpu_custom_call.1} parent=47 // pred_check
          %p352 = pneg %p179
        $region62: #{tpu_custom_call.1} parent=47 // pred_check_branch
          %354 = sbr.rel (%p352) target = $region64
        $region63: #{tpu_custom_call.1} parent=47 // pred_region
          %355 = dma.done [#allocation11], 256
        $region64: #{tpu_custom_call.1} parent=47 // pred_fallthru
          _
        %s356 = sand.u32 %s46, 1
        %s357 = scalar_lea.sflag [#allocation5], %s356
        %s358 = sand.u32 %s46, 1
        %s359 = smul.addr %s358, 8
        %s360 = scalar_lea.vmem [#allocation4], %s359
        %p361 = pneg %p59
        %p362 = pneg %p56
        %p363 = pneg %p80
        %p364 = pneg %p77
        %p365 = pneg %p106
        %p366 = pneg %p103
        %p367 = pneg %p132
        %p368 = pneg %p129
        %p369 = pneg %p153
        %p370 = pneg %p150
        %p371 = pneg %p179
        %p372 = pneg %p176
        %p373 = scmp.lt.s32.totalorder %s30, 1
        %s374 = scalar_select %p373, %s30, 1
        %s375 = scalar_lea.vmem %s6, %s374
        %p376 = pneg %p205
        %p377 = pneg %p202
        %p378 = pneg %p231
        %p379 = pneg %p228
        %s380 = sand.u32 %s218, 1
        %s381 = scalar_lea.sflag [#allocation6], %s380
        %s382 = sand.u32 %s218, 1
        %s383 = smul.addr %s382, 8
        %s384 = scalar_lea.vmem [#allocation12], %s383
        %s385 = smul.u32 2, %s31
        %p386 = scmp.lt.s32.totalorder %s30, 1
        %s387 = scalar_select %p386, %s30, 1
        %s388 = scalar_lea.vmem %s6, %s387
        %p389 = scmp.eq.s32.totalorder %s31, 0
        // Predicated region
        $region65: #{tpu_custom_call.1} parent=47 // pred_check
          %p390 = pneg %p389
        $region66: #{tpu_custom_call.1} parent=47 // pred_check_branch
          %392 = sbr.rel (%p390) target = $region68
        $region67: #{tpu_custom_call.1} parent=47 // pred_region
          %v393 = vld [vmem:[%s339] sm:$0xff]
          %v394 = vmul.f32 %v393, %v393
          %vm395 = vcmask 523264
          %v396 = vsel %vm395, %v394, 0.0
          %397 = vadd.xlane.f32.xlu0 %v396
          %v398 = vpop.xlane.xlu0 %397
          %v399 = vmax.f32 %v398, 1e-24
          %v400 = vrsqrt.pop %v399
          %v401 = vmul.f32 %v393, %v400
          %v402 = vmul.f32 %v401, 8.0
          %v403 = vld [vmem:[%s1] sm:$0x1]
          %v405 = vlaneseq
          %v406 = vshrl.u32 %v405, 7
          %v407 = vsub.s32 0, %v406
          %v408 = vrot.slane %v403, %v407
          %v410 = vmul.f32 %v402, %v408
          %411 = vst.msk [vmem:[#allocation2] sm:$0xff] %vm395, %v410
          %412 = vst.msk [vmem:[#allocation3] sm:$0xff] %vm395, 0.0
        $region68: #{tpu_custom_call.1} parent=47 // pred_fallthru
          _
        %v413 = vld [vmem:[#allocation2] sm:$0xff]
        %v414 = vld [vmem:[#allocation7] sm:$0xff]
        %v415 = vld [vmem:[#allocation7 + $0x8] sm:$0xff]
        %v416 = vld [vmem:[#allocation7 + $0x10] sm:$0xff]
        %v417 = vld [vmem:[#allocation7 + $0x18] sm:$0xff]
        %v418 = vld [vmem:[#allocation7 + $0x20] sm:$0xff]
        %v419 = vld [vmem:[#allocation7 + $0x28] sm:$0xff]
        %v420 = vld [vmem:[#allocation7 + $0x30] sm:$0xff]
        %v421 = vld [vmem:[#allocation7 + $0x38] sm:$0xff]
        %v422 = vld [vmem:[#allocation7 + $0x40] sm:$0xff]
        %v423 = vld [vmem:[#allocation7 + $0x48] sm:$0xff]
        %v424 = vld [vmem:[#allocation7 + $0x50] sm:$0xff]
        %v425 = vld [vmem:[#allocation7 + $0x58] sm:$0xff]
        %v426 = vld [vmem:[#allocation7 + $0x60] sm:$0xff]
        %v427 = vld [vmem:[#allocation7 + $0x68] sm:$0xff]
        %v428 = vld [vmem:[#allocation7 + $0x70] sm:$0xff]
        %v429 = vld [vmem:[#allocation7 + $0x78] sm:$0xff]
        %vm430 = vcmask 523264
        %v432 = vsel %vm430, %v413, 0
        %434 = vmatprep.subr.mxu0 0.0
        %435 = vmatpush1.msra.mxu0 0.0
        %436 = vmatprep.subr.mxu0 0.0
        %437 = vmatpush1.msra.mxu0 0.0
        %438 = vmatprep.subr.mxu0 0.0
        %439 = vmatpush1.msra.mxu0 0.0
        %440 = vmatprep.subr.mxu0 0.0
        %441 = vmatpush1.msra.mxu0 0.0
        %442 = vmatprep.subr.mxu0 0.0
        %443 = vmatpush1.msra.mxu0 0.0
        %444 = vmatprep.subr.mxu0 0.0
        %445 = vmatpush1.msra.mxu0 0.0
        %446 = vmatprep.subr.mxu0 0.0
        %447 = vmatpush1.msra.mxu0 0.0
        %448 = vmatprep.subr.mxu0 0.0
        %449 = vmatpush1.msra.mxu0 0.0
        %450 = vmatprep.subr.mxu0 %v429
        %451 = vmatpush1.msra.mxu0 %v428
        %452 = vmatprep.subr.mxu0 %v427
        %453 = vmatpush1.msra.mxu0 %v426
        %454 = vmatprep.subr.mxu0 %v425
        %455 = vmatpush1.msra.mxu0 %v424
        %456 = vmatprep.subr.mxu0 %v423
        %457 = vmatpush1.msra.mxu0 %v422
        %458 = vmatprep.subr.mxu0 %v421
        %459 = vmatpush1.msra.mxu0 %v420
        %460 = vmatprep.subr.mxu0 %v419
        %461 = vmatpush1.msra.mxu0 %v418
        %462 = vmatprep.subr.mxu0 %v417
        %463 = vmatpush1.msra.mxu0 %v416
        %464 = vmatprep.subr.mxu0 %v415
        %465 = vmatpush1.msra.mxu0 %v414
        %466 = vmatprep.subr.mxu0 0.0
        %467 = vmatpush2.msra.mxu0 0.0
        %468 = vmatprep.subr.mxu0 0.0
        %469 = vmatpush2.msra.mxu0 0.0
        %470 = vmatprep.subr.mxu0 0.0
        %471 = vmatpush2.msra.mxu0 0.0
        %472 = vmatprep.subr.mxu0 0.0
        %473 = vmatpush2.msra.mxu0 0.0
        %474 = vmatprep.subr.mxu0 0.0
        %475 = vmatpush2.msra.mxu0 0.0
        %476 = vmatprep.subr.mxu0 0.0
        %477 = vmatpush2.msra.mxu0 0.0
        %478 = vmatprep.subr.mxu0 0.0
        %479 = vmatpush2.msra.mxu0 0.0
        %480 = vmatprep.subr.mxu0 0.0
        %481 = vmatpush2.msra.mxu0 0.0
        %482 = vmatprep.subr.mxu0 0.0
        %483 = vmatpush2.msra.mxu0 0.0
        %484 = vmatprep.subr.mxu0 0.0
        %485 = vmatpush2.msra.mxu0 0.0
        %486 = vmatprep.subr.mxu0 0.0
        %487 = vmatpush2.msra.mxu0 0.0
        %488 = vmatprep.subr.mxu0 0.0
        %489 = vmatpush2.msra.mxu0 0.0
        %490 = vmatprep.subr.mxu0 0.0
        %491 = vmatpush2.msra.mxu0 0.0
        %492 = vmatprep.subr.mxu0 0.0
        %493 = vmatpush2.msra.mxu0 0.0
        %494 = vmatprep.subr.mxu0 0.0
        %495 = vmatpush2.msra.mxu0 0.0
        %496 = vmatprep.subr.mxu0 0.0
        %497 = vmatpush2.msra.mxu0 0.0
        %498 = vmatprep.mubr.f32.mxu0 0.0
        %499 = vmatmul.mubr.f32.gmra.mxu0 %v432
        %v500 = vpop.f32.mrf.mxu0
        %v501 = vadd.f32 0.0, %v500
        %v502 = vpop.f32.mrf.mxu0
        %v503 = vadd.f32 0.0, %v502
        %504 = vdwg.mxu0
        %v505 = vld [vmem:[%s388] sm:$0x1]
        %vm506 = vcmp.ne.f32.partialorder %v505, 0.0
        %v507 = vld [vmem:[#allocation10] sm:$0xff]
        %509 = vrot.lane.b32.xlu0 %v501, 64
        %v510 = vpop.permute.xlu0 %509
        %vm511 = vcmask 261120
        %v512 = vsel %vm511, %v501, 0
        %v514 = vsel %vm511, %v510, 0
        %516 = vmatprep.subr.mxu0 0.0
        %517 = vmatpush1.xpose.msra.mxu0 0.0
        %518 = vmatprep.subr.mxu0 0.0
        %519 = vmatpush1.xpose.msra.mxu0 0.0
        %520 = vmatprep.subr.mxu0 0.0
        %521 = vmatpush1.xpose.msra.mxu0 0.0
        %522 = vmatprep.subr.mxu0 0.0
        %523 = vmatpush1.xpose.msra.mxu0 0.0
        %524 = vmatprep.subr.mxu0 0.0
        %525 = vmatpush1.xpose.msra.mxu0 0.0
        %526 = vmatprep.subr.mxu0 0.0
        %527 = vmatpush1.xpose.msra.mxu0 0.0
        %528 = vmatprep.subr.mxu0 0.0
        %529 = vmatpush1.xpose.msra.mxu0 0.0
        %530 = vmatprep.subr.mxu0 0.0
        %531 = vmatpush1.xpose.msra.mxu0 0.0
        %532 = vmatprep.subr.mxu0 0.0
        %533 = vmatpush1.xpose.msra.mxu0 0.0
        %534 = vmatprep.subr.mxu0 0.0
        %535 = vmatpush1.xpose.msra.mxu0 0.0
        %536 = vmatprep.subr.mxu0 0.0
        %537 = vmatpush1.xpose.msra.mxu0 0.0
        %538 = vmatprep.subr.mxu0 0.0
        %539 = vmatpush1.xpose.msra.mxu0 0.0
        %540 = vmatprep.subr.mxu0 0.0
        %541 = vmatpush1.xpose.msra.mxu0 0.0
        %542 = vmatprep.subr.mxu0 0.0
        %543 = vmatpush1.xpose.msra.mxu0 0.0
        %544 = vmatprep.subr.mxu0 0.0
        %545 = vmatpush1.xpose.msra.mxu0 0.0
        %546 = vmatprep.subr.mxu0 0.0
        %547 = vmatpush1.xpose.msra.mxu0 %v514
        %548 = vmatprep.subr.mxu0 0.0
        %549 = vmatpush2.xpose.msra.mxu0 0.0
        %550 = vmatprep.subr.mxu0 0.0
        %551 = vmatpush2.xpose.msra.mxu0 0.0
        %552 = vmatprep.subr.mxu0 0.0
        %553 = vmatpush2.xpose.msra.mxu0 0.0
        %554 = vmatprep.subr.mxu0 0.0
        %555 = vmatpush2.xpose.msra.mxu0 0.0
        %556 = vmatprep.subr.mxu0 0.0
        %557 = vmatpush2.xpose.msra.mxu0 0.0
        %558 = vmatprep.subr.mxu0 0.0
        %559 = vmatpush2.xpose.msra.mxu0 0.0
        %560 = vmatprep.subr.mxu0 0.0
        %561 = vmatpush2.xpose.msra.mxu0 0.0
        %562 = vmatprep.subr.mxu0 0.0
        %563 = vmatpush2.xpose.msra.mxu0 0.0
        %564 = vmatprep.subr.mxu0 0.0
        %565 = vmatpush2.xpose.msra.mxu0 0.0
        %566 = vmatprep.subr.mxu0 0.0
        %567 = vmatpush2.xpose.msra.mxu0 0.0
        %568 = vmatprep.subr.mxu0 0.0
        %569 = vmatpush2.xpose.msra.mxu0 0.0
        %570 = vmatprep.subr.mxu0 0.0
        %571 = vmatpush2.xpose.msra.mxu0 0.0
        %572 = vmatprep.subr.mxu0 0.0
        %573 = vmatpush2.xpose.msra.mxu0 0.0
        %574 = vmatprep.subr.mxu0 0.0
        %575 = vmatpush2.xpose.msra.mxu0 0.0
        %576 = vmatprep.subr.mxu0 0.0
        %577 = vmatpush2.xpose.msra.mxu0 0.0
        %578 = vmatprep.subr.mxu0 0.0
        %579 = vmatpush2.xpose.msra.mxu0 0.0
        %580 = vmatprep.mubr.f32.mxu0 0.0
        %581 = vmatmul.mubr.f32.gmra.mxu0 %v512
        %v582 = vpop.f32.mrf.mxu0
        %v583 = vadd.f32 %v507, %v582
        %v584 = vpop.f32.mrf.mxu0
        %585 = vdwg.mxu0
        %v586 = vsel %vm506, 1, 0
        %v587 = vlaneseq
        %v588 = vshrl.u32 %v587, 7
        %v589 = vsub.s32 0, %v588
        %v590 = vrot.slane %v586, %v589
        %vm591 = vcmp.eq.s32.totalorder %v590, 1
        %v592 = vsel %vm591, %v583, -3.4028235e+38
        %vm593 = vcmask 64512
        %v594 = vsel %vm593, %v592, -inf
        %595 = vmax.xlane.f32.xlu0 %v594
        %v596 = vpop.xlane.xlu0 %595
        %v597 = vsub.f32 %v592, %v596
        %v598 = vmul.f32 %v597, 1.442695
        %v599 = vpow.pop %v598
        %v600 = vsel %vm593, %v599, 0.0
        %601 = vadd.xlane.f32.xlu0 %v600
        %v602 = vpop.xlane.xlu0 %601
        %v604 = vsel %vm593, %v599, 0
        %606 = vmatprep.subr.mxu0 0.0
        %607 = vmatpush1.msra.mxu0 0.0
        %608 = vmatprep.subr.mxu0 0.0
        %609 = vmatpush1.msra.mxu0 0.0
        %610 = vmatprep.subr.mxu0 0.0
        %611 = vmatpush1.msra.mxu0 0.0
        %612 = vmatprep.subr.mxu0 0.0
        %613 = vmatpush1.msra.mxu0 0.0
        %614 = vmatprep.subr.mxu0 0.0
        %615 = vmatpush1.msra.mxu0 0.0
        %616 = vmatprep.subr.mxu0 0.0
        %617 = vmatpush1.msra.mxu0 0.0
        %618 = vmatprep.subr.mxu0 0.0
        %619 = vmatpush1.msra.mxu0 0.0
        %620 = vmatprep.subr.mxu0 0.0
        %621 = vmatpush1.msra.mxu0 0.0
        %622 = vmatprep.subr.mxu0 0.0
        %623 = vmatpush1.msra.mxu0 0.0
        %624 = vmatprep.subr.mxu0 0.0
        %625 = vmatpush1.msra.mxu0 0.0
        %626 = vmatprep.subr.mxu0 0.0
        %627 = vmatpush1.msra.mxu0 0.0
        %628 = vmatprep.subr.mxu0 0.0
        %629 = vmatpush1.msra.mxu0 0.0
        %630 = vmatprep.subr.mxu0 0.0
        %631 = vmatpush1.msra.mxu0 0.0
        %632 = vmatprep.subr.mxu0 0.0
        %633 = vmatpush1.msra.mxu0 0.0
        %634 = vmatprep.subr.mxu0 0.0
        %635 = vmatpush1.msra.mxu0 0.0
        %636 = vmatprep.subr.mxu0 0.0
        %637 = vmatpush1.msra.mxu0 %v503
        %638 = vmatprep.subr.mxu0 0.0
        %639 = vmatpush2.msra.mxu0 0.0
        %640 = vmatprep.subr.mxu0 0.0
        %641 = vmatpush2.msra.mxu0 0.0
        %642 = vmatprep.subr.mxu0 0.0
        %643 = vmatpush2.msra.mxu0 0.0
        %644 = vmatprep.subr.mxu0 0.0
        %645 = vmatpush2.msra.mxu0 0.0
        %646 = vmatprep.subr.mxu0 0.0
        %647 = vmatpush2.msra.mxu0 0.0
        %648 = vmatprep.subr.mxu0 0.0
        %649 = vmatpush2.msra.mxu0 0.0
        %650 = vmatprep.subr.mxu0 0.0
        %651 = vmatpush2.msra.mxu0 0.0
        %652 = vmatprep.subr.mxu0 0.0
        %653 = vmatpush2.msra.mxu0 0.0
        %654 = vmatprep.subr.mxu0 0.0
        %655 = vmatpush2.msra.mxu0 0.0
        %656 = vmatprep.subr.mxu0 0.0
        %657 = vmatpush2.msra.mxu0 0.0
        %658 = vmatprep.subr.mxu0 0.0
        %659 = vmatpush2.msra.mxu0 0.0
        %660 = vmatprep.subr.mxu0 0.0
        %661 = vmatpush2.msra.mxu0 0.0
        %662 = vmatprep.subr.mxu0 0.0
        %663 = vmatpush2.msra.mxu0 0.0
        %664 = vmatprep.subr.mxu0 0.0
        %665 = vmatpush2.msra.mxu0 0.0
        %666 = vmatprep.subr.mxu0 0.0
        %667 = vmatpush2.msra.mxu0 0.0
        %668 = vmatprep.subr.mxu0 0.0
        %669 = vmatpush2.msra.mxu0 0.0
        %670 = vmatprep.mubr.f32.mxu0 0.0
        %671 = vmatmul.mubr.f32.gmra.mxu0 %v604
        %v672 = vpop.f32.mrf.mxu0
        %v673 = vadd.f32 0.0, %v672
        %v674 = vpop.f32.mrf.mxu0
        %675 = vdwg.mxu0
        %v676 = vrcp.pop %v602
        %v677 = vmul.f32 %v673, %v676
        %s678 = scalar_lea.vmem [#allocation10], 8
        %v679 = vld [vmem:[%s678] sm:$0xff]
        %680 = vrot.lane.b32.xlu0 %v501, 96
        %v681 = vpop.permute.xlu0 %680
        %682 = vrot.lane.b32.xlu0 %v501, 32
        %v683 = vpop.permute.xlu0 %682
        %v684 = vsel %vm511, %v681, 0
        %v686 = vsel %vm511, %v683, 0
        %688 = vmatprep.subr.mxu0 0.0
        %689 = vmatpush1.xpose.msra.mxu0 0.0
        %690 = vmatprep.subr.mxu0 0.0
        %691 = vmatpush1.xpose.msra.mxu0 0.0
        %692 = vmatprep.subr.mxu0 0.0
        %693 = vmatpush1.xpose.msra.mxu0 0.0
        %694 = vmatprep.subr.mxu0 0.0
        %695 = vmatpush1.xpose.msra.mxu0 0.0
        %696 = vmatprep.subr.mxu0 0.0
        %697 = vmatpush1.xpose.msra.mxu0 0.0
        %698 = vmatprep.subr.mxu0 0.0
        %699 = vmatpush1.xpose.msra.mxu0 0.0
        %700 = vmatprep.subr.mxu0 0.0
        %701 = vmatpush1.xpose.msra.mxu0 0.0
        %702 = vmatprep.subr.mxu0 0.0
        %703 = vmatpush1.xpose.msra.mxu0 0.0
        %704 = vmatprep.subr.mxu0 0.0
        %705 = vmatpush1.xpose.msra.mxu0 0.0
        %706 = vmatprep.subr.mxu0 0.0
        %707 = vmatpush1.xpose.msra.mxu0 0.0
        %708 = vmatprep.subr.mxu0 0.0
        %709 = vmatpush1.xpose.msra.mxu0 0.0
        %710 = vmatprep.subr.mxu0 0.0
        %711 = vmatpush1.xpose.msra.mxu0 0.0
        %712 = vmatprep.subr.mxu0 0.0
        %713 = vmatpush1.xpose.msra.mxu0 0.0
        %714 = vmatprep.subr.mxu0 0.0
        %715 = vmatpush1.xpose.msra.mxu0 0.0
        %716 = vmatprep.subr.mxu0 0.0
        %717 = vmatpush1.xpose.msra.mxu0 0.0
        %718 = vmatprep.subr.mxu0 0.0
        %719 = vmatpush1.xpose.msra.mxu0 %v686
        %720 = vmatprep.subr.mxu0 0.0
        %721 = vmatpush2.xpose.msra.mxu0 0.0
        %722 = vmatprep.subr.mxu0 0.0
        %723 = vmatpush2.xpose.msra.mxu0 0.0
        %724 = vmatprep.subr.mxu0 0.0
        %725 = vmatpush2.xpose.msra.mxu0 0.0
        %726 = vmatprep.subr.mxu0 0.0
        %727 = vmatpush2.xpose.msra.mxu0 0.0
        %728 = vmatprep.subr.mxu0 0.0
        %729 = vmatpush2.xpose.msra.mxu0 0.0
        %730 = vmatprep.subr.mxu0 0.0
        %731 = vmatpush2.xpose.msra.mxu0 0.0
        %732 = vmatprep.subr.mxu0 0.0
        %733 = vmatpush2.xpose.msra.mxu0 0.0
        %734 = vmatprep.subr.mxu0 0.0
        %735 = vmatpush2.xpose.msra.mxu0 0.0
        %736 = vmatprep.subr.mxu0 0.0
        %737 = vmatpush2.xpose.msra.mxu0 0.0
        %738 = vmatprep.subr.mxu0 0.0
        %739 = vmatpush2.xpose.msra.mxu0 0.0
        %740 = vmatprep.subr.mxu0 0.0
        %741 = vmatpush2.xpose.msra.mxu0 0.0
        %742 = vmatprep.subr.mxu0 0.0
        %743 = vmatpush2.xpose.msra.mxu0 0.0
        %744 = vmatprep.subr.mxu0 0.0
        %745 = vmatpush2.xpose.msra.mxu0 0.0
        %746 = vmatprep.subr.mxu0 0.0
        %747 = vmatpush2.xpose.msra.mxu0 0.0
        %748 = vmatprep.subr.mxu0 0.0
        %749 = vmatpush2.xpose.msra.mxu0 0.0
        %750 = vmatprep.subr.mxu0 0.0
        %751 = vmatpush2.xpose.msra.mxu0 0.0
        %752 = vmatprep.mubr.f32.mxu0 0.0
        %753 = vmatmul.mubr.f32.gmra.mxu0 %v684
        %v754 = vpop.f32.mrf.mxu0
        %v755 = vadd.f32 %v679, %v754
        %v756 = vpop.f32.mrf.mxu0
        %757 = vdwg.mxu0
        %v758 = vsel %vm591, %v755, -3.4028235e+38
        %v759 = vsel %vm593, %v758, -inf
        %760 = vmax.xlane.f32.xlu0 %v759
        %v761 = vpop.xlane.xlu0 %760
        %v762 = vsub.f32 %v758, %v761
        %v763 = vmul.f32 %v762, 1.442695
        %v764 = vpow.pop %v763
        %v765 = vsel %vm593, %v764, 0.0
        %766 = vadd.xlane.f32.xlu0 %v765
        %v767 = vpop.xlane.xlu0 %766
        %769 = vrot.lane.b32.xlu0 %v503, 96
        %v770 = vpop.permute.xlu0 %769
        %v773 = vsel %vm593, %v764, 0
        %775 = vmatprep.subr.mxu0 0.0
        %776 = vmatpush1.msra.mxu0 0.0
        %777 = vmatprep.subr.mxu0 0.0
        %778 = vmatpush1.msra.mxu0 0.0
        %779 = vmatprep.subr.mxu0 0.0
        %780 = vmatpush1.msra.mxu0 0.0
        %781 = vmatprep.subr.mxu0 0.0
        %782 = vmatpush1.msra.mxu0 0.0
        %783 = vmatprep.subr.mxu0 0.0
        %784 = vmatpush1.msra.mxu0 0.0
        %785 = vmatprep.subr.mxu0 0.0
        %786 = vmatpush1.msra.mxu0 0.0
        %787 = vmatprep.subr.mxu0 0.0
        %788 = vmatpush1.msra.mxu0 0.0
        %789 = vmatprep.subr.mxu0 0.0
        %790 = vmatpush1.msra.mxu0 0.0
        %791 = vmatprep.subr.mxu0 0.0
        %792 = vmatpush1.msra.mxu0 0.0
        %793 = vmatprep.subr.mxu0 0.0
        %794 = vmatpush1.msra.mxu0 0.0
        %795 = vmatprep.subr.mxu0 0.0
        %796 = vmatpush1.msra.mxu0 0.0
        %797 = vmatprep.subr.mxu0 0.0
        %798 = vmatpush1.msra.mxu0 0.0
        %799 = vmatprep.subr.mxu0 0.0
        %800 = vmatpush1.msra.mxu0 0.0
        %801 = vmatprep.subr.mxu0 0.0
        %802 = vmatpush1.msra.mxu0 0.0
        %803 = vmatprep.subr.mxu0 0.0
        %804 = vmatpush1.msra.mxu0 0.0
        %805 = vmatprep.subr.mxu0 0.0
        %806 = vmatpush1.msra.mxu0 %v770
        %807 = vmatprep.subr.mxu0 0.0
        %808 = vmatpush2.msra.mxu0 0.0
        %809 = vmatprep.subr.mxu0 0.0
        %810 = vmatpush2.msra.mxu0 0.0
        %811 = vmatprep.subr.mxu0 0.0
        %812 = vmatpush2.msra.mxu0 0.0
        %813 = vmatprep.subr.mxu0 0.0
        %814 = vmatpush2.msra.mxu0 0.0
        %815 = vmatprep.subr.mxu0 0.0
        %816 = vmatpush2.msra.mxu0 0.0
        %817 = vmatprep.subr.mxu0 0.0
        %818 = vmatpush2.msra.mxu0 0.0
        %819 = vmatprep.subr.mxu0 0.0
        %820 = vmatpush2.msra.mxu0 0.0
        %821 = vmatprep.subr.mxu0 0.0
        %822 = vmatpush2.msra.mxu0 0.0
        %823 = vmatprep.subr.mxu0 0.0
        %824 = vmatpush2.msra.mxu0 0.0
        %825 = vmatprep.subr.mxu0 0.0
        %826 = vmatpush2.msra.mxu0 0.0
        %827 = vmatprep.subr.mxu0 0.0
        %828 = vmatpush2.msra.mxu0 0.0
        %829 = vmatprep.subr.mxu0 0.0
        %830 = vmatpush2.msra.mxu0 0.0
        %831 = vmatprep.subr.mxu0 0.0
        %832 = vmatpush2.msra.mxu0 0.0
        %833 = vmatprep.subr.mxu0 0.0
        %834 = vmatpush2.msra.mxu0 0.0
        %835 = vmatprep.subr.mxu0 0.0
        %836 = vmatpush2.msra.mxu0 0.0
        %837 = vmatprep.subr.mxu0 0.0
        %838 = vmatpush2.msra.mxu0 0.0
        %839 = vmatprep.mubr.f32.mxu0 0.0
        %840 = vmatmul.mubr.f32.gmra.mxu0 %v773
        %v841 = vpop.f32.mrf.mxu0
        %v842 = vadd.f32 0.0, %v841
        %v843 = vpop.f32.mrf.mxu0
        %844 = vdwg.mxu0
        %v845 = vrcp.pop %v767
        %v846 = vmul.f32 %v842, %v845
        %848 = vrot.lane.b32.xlu0 %v846, 32
        %v849 = vpop.permute.xlu0 %848
        %v851 = vsel %vm511, %v677, %v849
        %v852 = vld [vmem:[#allocation3] sm:$0xff]
        %v853 = vld [vmem:[#allocation9] sm:$0xff]
        %v854 = vld [vmem:[#allocation9 + $0x8] sm:$0xff]
        %v855 = vld [vmem:[#allocation9 + $0x10] sm:$0xff]
        %v856 = vld [vmem:[#allocation9 + $0x18] sm:$0xff]
        %v857 = vld [vmem:[#allocation9 + $0x20] sm:$0xff]
        %v858 = vld [vmem:[#allocation9 + $0x28] sm:$0xff]
        %v859 = vld [vmem:[#allocation9 + $0x30] sm:$0xff]
        %v860 = vld [vmem:[#allocation9 + $0x38] sm:$0xff]
        %v862 = vsel %vm430, %v851, 0
        %864 = vmatprep.subr.mxu0 0.0
        %865 = vmatpush1.msra.mxu0 0.0
        %866 = vmatprep.subr.mxu0 0.0
        %867 = vmatpush1.msra.mxu0 0.0
        %868 = vmatprep.subr.mxu0 0.0
        %869 = vmatpush1.msra.mxu0 0.0
        %870 = vmatprep.subr.mxu0 0.0
        %871 = vmatpush1.msra.mxu0 0.0
        %872 = vmatprep.subr.mxu0 0.0
        %873 = vmatpush1.msra.mxu0 0.0
        %874 = vmatprep.subr.mxu0 0.0
        %875 = vmatpush1.msra.mxu0 0.0
        %876 = vmatprep.subr.mxu0 0.0
        %877 = vmatpush1.msra.mxu0 0.0
        %878 = vmatprep.subr.mxu0 0.0
        %879 = vmatpush1.msra.mxu0 0.0
        %880 = vmatprep.subr.mxu0 0.0
        %881 = vmatpush1.msra.mxu0 %v860
        %882 = vmatprep.subr.mxu0 0.0
        %883 = vmatpush1.msra.mxu0 %v859
        %884 = vmatprep.subr.mxu0 0.0
        %885 = vmatpush1.msra.mxu0 %v858
        %886 = vmatprep.subr.mxu0 0.0
        %887 = vmatpush1.msra.mxu0 %v857
        %888 = vmatprep.subr.mxu0 0.0
        %889 = vmatpush1.msra.mxu0 %v856
        %890 = vmatprep.subr.mxu0 0.0
        %891 = vmatpush1.msra.mxu0 %v855
        %892 = vmatprep.subr.mxu0 0.0
        %893 = vmatpush1.msra.mxu0 %v854
        %894 = vmatprep.subr.mxu0 0.0
        %895 = vmatpush1.msra.mxu0 %v853
        %896 = vmatprep.subr.mxu0 0.0
        %897 = vmatpush2.msra.mxu0 0.0
        %898 = vmatprep.subr.mxu0 0.0
        %899 = vmatpush2.msra.mxu0 0.0
        %900 = vmatprep.subr.mxu0 0.0
        %901 = vmatpush2.msra.mxu0 0.0
        %902 = vmatprep.subr.mxu0 0.0
        %903 = vmatpush2.msra.mxu0 0.0
        %904 = vmatprep.subr.mxu0 0.0
        %905 = vmatpush2.msra.mxu0 0.0
        %906 = vmatprep.subr.mxu0 0.0
        %907 = vmatpush2.msra.mxu0 0.0
        %908 = vmatprep.subr.mxu0 0.0
        %909 = vmatpush2.msra.mxu0 0.0
        %910 = vmatprep.subr.mxu0 0.0
        %911 = vmatpush2.msra.mxu0 0.0
        %912 = vmatprep.subr.mxu0 0.0
        %913 = vmatpush2.msra.mxu0 0.0
        %914 = vmatprep.subr.mxu0 0.0
        %915 = vmatpush2.msra.mxu0 0.0
        %916 = vmatprep.subr.mxu0 0.0
        %917 = vmatpush2.msra.mxu0 0.0
        %918 = vmatprep.subr.mxu0 0.0
        %919 = vmatpush2.msra.mxu0 0.0
        %920 = vmatprep.subr.mxu0 0.0
        %921 = vmatpush2.msra.mxu0 0.0
        %922 = vmatprep.subr.mxu0 0.0
        %923 = vmatpush2.msra.mxu0 0.0
        %924 = vmatprep.subr.mxu0 0.0
        %925 = vmatpush2.msra.mxu0 0.0
        %926 = vmatprep.subr.mxu0 0.0
        %927 = vmatpush2.msra.mxu0 0.0
        %928 = vmatprep.mubr.f32.mxu0 0.0
        %929 = vmatmul.mubr.f32.gmra.mxu0 %v862
        %v930 = vpop.f32.mrf.mxu0
        %v931 = vadd.f32 0.0, %v930
        %v932 = vpop.f32.mrf.mxu0
        %933 = vdwg.mxu0
        %v934 = vadd.f32 %v852, %v931
        %935 = vst.msk [vmem:[#allocation3] sm:$0xff] %vm430, %v934
        // Predicated region
        $region69: #{tpu_custom_call.1} parent=47 // pred_check
          %p936 = pneg %p389
        $region70: #{tpu_custom_call.1} parent=47 // pred_check_branch
          %938 = sbr.rel (%p936) target = $region72
        $region71: #{tpu_custom_call.1} parent=47 // pred_region
          %v939 = vld [vmem:[#allocation3] sm:$0xff]
          %v940 = vld [vmem:[%s4] sm:$0x1]
          %v942 = vlaneseq
          %v943 = vshrl.u32 %v942, 7
          %v944 = vsub.s32 0, %v943
          %v945 = vrot.slane %v940, %v944
          %v947 = vadd.f32 %v939, %v945
          %948 = vst.msk [vmem:[%s384] sm:$0xff] %vm430, %v947
        $region72: #{tpu_custom_call.1} parent=47 // pred_fallthru
          _
        %s949 = sand.u32 %s218, 1
        %s950 = scalar_lea.sflag [#allocation6], %s949
        %s951 = sand.u32 %s218, 1
        %s952 = smul.addr %s951, 8
        %s953 = scalar_lea.vmem [#allocation12], %s952
        // Predicated region
        $region73: #{tpu_custom_call.1} parent=47 // pred_check
          %p954 = pneg %p228
        $region74: #{tpu_custom_call.1} parent=47 // pred_check_branch
          %956 = sbr.rel (%p954) target = $region76
        $region75: #{tpu_custom_call.1} parent=47 // pred_region
          %s958 = ssub.s32 128, 128
          %959 = vsyncadd %s950, %s958
          %s960 = smul.addr %s30, 128
          %s961 = scalar_lea.hbm %s7, %s960
          %s963 = sshll.u32 %s953, 4
          %s964 = int_to_ptr.vmem [resolvable:$true] %s963
          %966 = dma.vmem_to_hbm [thread:$0]  %s964, 128, %s961, %s950
        $region76: #{tpu_custom_call.1} parent=47 // pred_fallthru
          _
      $region48: #{tpu_custom_call.1} parent=5 // pred_fallthru
        _
      %p967 = scmp.le.s32.totalorder 2, %s21
      // Predicated region
      $region77: #{tpu_custom_call.1} parent=5 // pred_check
        %p968 = pneg %p967
      $region78: #{tpu_custom_call.1} parent=5 // pred_check_branch
        %970 = sbr.rel (%p968) target = $region80
      $region79: #{tpu_custom_call.1} parent=5 // pred_region
        %s971 = ssub.s32 %s21, 2
        // Predicated region
        $region81: #{tpu_custom_call.1} parent=79 // pred_check
          %p972 = pneg %p234
        $region82: #{tpu_custom_call.1} parent=79 // pred_check_branch
          %974 = sbr.rel (%p972) target = $region84
        $region83: #{tpu_custom_call.1} parent=79 // pred_region
          %s975 = sand.u32 %s219, 1
          %s976 = scalar_lea.sflag [#allocation6], %s975
          %s977 = sand.u32 %s219, 1
          %s978 = smul.addr %s977, 8
          %s979 = scalar_lea.vmem [#allocation12], %s978
          %980 = dma.done %s976, 128
        $region84: #{tpu_custom_call.1} parent=79 // pred_fallthru
          _
      $region80: #{tpu_custom_call.1} parent=5 // pred_fallthru
        _
    $region6: #{tpu_custom_call.1} parent=1 // loop_footer
      %s25 = sadd.s32 1, %s21
    $region7: #{tpu_custom_call.1} parent=1 // loop_footer_branch
      %20 = sbr.rel target = $region3
    $region8: #{tpu_custom_call.1} parent=1 // loop_exit
      _
    %981 = vsyncpa [#allocation5], 1
    %s982 = scalar_lea.sflag [#allocation5], 1
    %983 = vsyncpa %s982, 1
    %984 = vsyncpa [#allocation8], 1
    %985 = vsyncpa [#allocation11], 1
    %986 = vsyncpa [#allocation6], 1
    %s987 = scalar_lea.sflag [#allocation6], 1
    %988 = vsyncpa %s987, 1

</llo_original>
